<compile_context>
chip_gen: v6e
topology: v6e:2x2x1
jax: 0.10.0
libtpu: 0.0.40
codegen_flags: <defaults>
</compile_context>

<pallas_src>
import jax
import jax.numpy as jnp
import numpy as np
from jax.experimental import pallas as pl
from jax.experimental.pallas import tpu as pltpu

CMD_TARGET_GATHER = 1
CMD_TARGET_ATTACK = 2
CMD_TARGET_BUILD_BUILDING = 3
CMD_TARGET_BUILD_UNIT = 4
CMD_TARGET_MOVE = 5

EXEC_HEADS = {
    "cmd_type_prob": 6,
    "gather_idx_prob": 8,
    "attack_idx_prob": 8,
    "unit_type_prob": 16,
    "building_type_prob": 16,
    "building_loc_prob": 32 * 32,   # loc = y * 32 + x
    "move_loc_prob": 32 * 32,
}

SAMP_LANES = 128        # lane-dense sample / log-prob outputs (avoid vst.msk partial stores)
NEG_INF_BIAS = -1e30    # pad-column bias: softmax weight 0, never wins the sampling race

_ON_TPU = jax.default_backend() == "tpu"

# murmur3-style mixing constants (written as signed int32)
_H1 = -1640531535   # 0x9E3779B1
_H2 = -2048144789   # 0x85EBCA6B
_H3 = -1028477387   # 0xC2B2AE35


# ----------------------------------------------------------------------------------
# small helpers
# ----------------------------------------------------------------------------------
def _round_up(x, m):
    return ((x + m - 1) // m) * m


def _recip(x):
    """Approx EUP reciprocal on a real TPU backend; plain divide otherwise
    (pl.reciprocal is not guaranteed to lower on a CPU backend / interpret mode)."""
    if _ON_TPU:
        return pl.reciprocal(x, approx=True)
    return 1.0 / x


def _hash_u01(ctr, seed):
    """Counter-based uniform in [0,1): pure int32 VPU ops + a same-width bitcast.
    Portable (no pltpu.prng_*), wrapping int32 arithmetic is fine for RNG mixing."""
    x = ctr * _H1 + seed
    x = (x ^ ((x >> 16) & 0xFFFF)) * _H2        # masked arithmetic shift == logical shift
    x = (x ^ ((x >> 13) & 0x7FFFF)) * _H3
    x = x ^ ((x >> 16) & 0xFFFF)
    fbits = (x & 0x7FFFFF) | 0x3F800000         # mantissa trick -> float in [1, 2)
    return jax.lax.bitcast_convert_type(fbits, jnp.float32) - 1.0


def _device_tuning():
    """(vmem_limit_bytes, max rows per tile) per TPU generation (review guidance)."""
    kind = ""
    try:
        kind = jax.devices()[0].device_kind.lower()
    except Exception:
        pass
    if "v6" in kind:                 # 128 MiB physical VMEM -> bigger tiles pay off
        return 64 * 1024 * 1024, 512
    if "v5" in kind:                 # v5e: 128 MiB physical, default scoped 16 MiB
        return 64 * 1024 * 1024, 256
    return 48 * 1024 * 1024, 256     # v7x (64 MiB physical) and anything else


# ----------------------------------------------------------------------------------
# fused-head parameter packing
# ----------------------------------------------------------------------------------
def make_linear_params(key, h, c):
    kw, kb = jax.random.split(key)
    w = jax.random.normal(kw, (h, c), jnp.float32) * 0.1
    b = jax.random.normal(kb, (1, c), jnp.float32) * 0.01
    return w, b


def fuse_head_params(head_params):
    """Concat all heads along the class dim; each head padded to a 128-lane boundary.
    Pad columns: weight 0, bias -1e30 (softmax prob 0, never sampled)."""
    slices, w_parts, b_parts = [], [], []
    off = 0
    for name, (w, b) in head_params.items():
        h, c = w.shape
        cpad = _round_up(c, 128)
        wp = jnp.zeros((h, cpad), jnp.float32).at[:, :c].set(w)
        bp = jnp.full((1, cpad), NEG_INF_BIAS, jnp.float32).at[:, :c].set(b)
        w_parts.append(wp)
        b_parts.append(bp)
        slices.append((name, off, c, cpad))
        off += cpad
    return {
        "w": jnp.concatenate(w_parts, axis=1).astype(jnp.bfloat16),   # bf16 MXU weights
        "b": jnp.concatenate(b_parts, axis=1),                        # f32 bias
        "slices": tuple(slices),
        "c_pad": off,
    }


# ----------------------------------------------------------------------------------
# Pallas kernels
# ----------------------------------------------------------------------------------
def _make_executor_kernel(head_slices, num_heads, max_cpad, samp_lanes):
    """One bf16 matmul for all heads of one executor tile + per-head softmax (bf16
    writeback), exponential-race sampling reusing the softmax exp, and exact
    logit-based log-prob, emitted as lane-dense outputs."""
    def kernel(seed_ref, x_ref, emb_ref, w_ref, b_ref, probs_ref, samp_ref, logp_ref):
        e_id = pl.program_id(0)
        seed = seed_ref[e_id]
        # unique block id across (executor, batch, u-tile) -> per-row RNG counter base
        gid = (e_id * pl.num_programs(1) + pl.program_id(1)) * pl.num_programs(2) \
            + pl.program_id(2)

        # feat formation folded in-kernel: unit features + per-batch instruction embedding
        x = (x_ref[...] + emb_ref[...]).astype(jnp.bfloat16)
        logits = jnp.dot(x, w_ref[...], preferred_element_type=jnp.float32) + b_ref[...]
        tm = x.shape[0]

        row = jax.lax.broadcasted_iota(jnp.int32, (tm, 1), 0) + gid * tm
        # one iota at max head width, sliced per head (iota is not CSE'd by JAX)
        cols_all = jax.lax.broadcasted_iota(jnp.int32, (tm, max_cpad), 1)
        head_lane = jax.lax.broadcasted_iota(jnp.int32, (tm, samp_lanes), 1)
        samp_out = jnp.zeros((tm, samp_lanes), jnp.int32)
        logp_out = jnp.zeros((tm, samp_lanes), jnp.float32)

        for idx, (off, c, cpad) in enumerate(head_slices):
            hl = logits[:, off:off + cpad]
            m = jnp.max(hl, axis=-1, keepdims=True)
            e = jnp.exp(hl - m)                       # pad cols -> exp(-huge) == 0
            s = jnp.sum(e, axis=-1, keepdims=True)
            probs_ref[:, off:off + cpad] = (e * _recip(s)).astype(probs_ref.dtype)

            cols = cols_all[:, :cpad]
            # noise generated per-head (nothing full-width held live across the loop)
            u = _hash_u01((row * num_heads + idx) * max_cpad + cols, seed)
            u = jnp.maximum(u, 1e-12)
            # exponential race: argmax(e_i / Exp_i) ~ Categorical(softmax(hl));
            # reuses e -> one log + one approx-rcp per element (no Gumbel double-log).
            z = e * _recip(-jnp.log(u))
            zmax = jnp.max(z, axis=-1, keepdims=True)
            mask = z >= zmax
            samp = jnp.min(jnp.where(mask, cols, cpad), axis=-1, keepdims=True)
            picked = jnp.max(jnp.where(mask, hl, NEG_INF_BIAS), axis=-1, keepdims=True)
            logp = picked - m - jnp.log(s)            # exact log-softmax at the sample
            samp_out = jnp.where(head_lane == idx, samp, samp_out)
            logp_out = jnp.where(head_lane == idx, logp, logp_out)

        samp_ref[...] = samp_out
        logp_ref[...] = logp_out
    return kernel


def _make_coach_kernel(num_insts, inst_sl, cont_sl, value_off):
    """Fused coach: inst/cont softmax + value + in-kernel sampling + log-probs.
    f32 output lanes: [0:NI]=inst_pi, [NI:NI+2]=cont_pi, NI+2=value, NI+3/NI+4=log-probs.
    i32 output lanes: 0=inst sample, 1=cont sample."""
    i_off, _i_c, i_cpad = inst_sl
    c_off, _c_c, c_cpad = cont_sl

    def kernel(seed_ref, x_ref, w_ref, b_ref, of_ref, oi_ref):
        seed = seed_ref[0]
        x = x_ref[...].astype(jnp.bfloat16)
        logits = jnp.dot(x, w_ref[...], preferred_element_type=jnp.float32) + b_ref[...]
        bsz = logits.shape[0]
        row = jax.lax.broadcasted_iota(jnp.int32, (bsz, 1), 0)

        def head(off, cpad, hidx):
            hl = logits[:, off:off + cpad]
            m = jnp.max(hl, axis=-1, keepdims=True)
            e = jnp.exp(hl - m)
            s = jnp.sum(e, axis=-1, keepdims=True)
            probs = e * _recip(s)
            cols = jax.lax.broadcasted_iota(jnp.int32, (bsz, cpad), 1)
            u = jnp.maximum(_hash_u01((row * 2 + hidx) * cpad + cols, seed), 1e-12)
            z = e * _recip(-jnp.log(u))
            zmax = jnp.max(z, axis=-1, keepdims=True)
            mask = z >= zmax
            samp = jnp.min(jnp.where(mask, cols, cpad), axis=-1, keepdims=True)
            picked = jnp.max(jnp.where(mask, hl, NEG_INF_BIAS), axis=-1, keepdims=True)
            logp = picked - m - jnp.log(s)
            return probs, samp, logp

        ipr, ismp, ilp = head(i_off, i_cpad, 0)
        cpr, csmp, clp = head(c_off, c_cpad, 1)
        value = logits[:, value_off:value_off + 1]

        lane = jax.lax.broadcasted_iota(jnp.int32, (bsz, 128), 1)
        out_f = jnp.where(lane < num_insts, ipr, 0.0)
        out_f = jnp.where(lane == num_insts, cpr[:, 0:1], out_f)
        out_f = jnp.where(lane == num_insts + 1, cpr[:, 1:2], out_f)
        out_f = jnp.where(lane == num_insts + 2, value, out_f)
        out_f = jnp.where(lane == num_insts + 3, ilp, out_f)
        out_f = jnp.where(lane == num_insts + 4, clp, out_f)
        of_ref[...] = out_f

        out_i = jnp.where(lane == 0, ismp, 0)
        out_i = jnp.where(lane == 1, csmp, out_i)
        oi_ref[...] = out_i
    return kernel


# ----------------------------------------------------------------------------------
# parameter construction
# ----------------------------------------------------------------------------------
def make_coach_params(key, hidden, num_insts):
    assert num_insts + 5 <= 128, "coach output layout assumes num_insts <= 123"
    k1, k2, k3, k4 = jax.random.split(key, 4)
    heads = {
        "inst": make_linear_params(k1, hidden, num_insts),
        "cont": make_linear_params(k2, hidden, 2),
        "value": make_linear_params(k3, hidden, 1),
    }
    fused = fuse_head_params(heads)
    sl = {name: (off, c, cpad) for (name, off, c, cpad) in fused["slices"]}
    return {
        "fused": fused,
        "num_insts": num_insts,
        "inst_emb": jax.random.normal(k4, (num_insts, hidden), jnp.float32) * 0.1,
        "kernel": _make_coach_kernel(num_insts, sl["inst"], sl["cont"], sl["value"][0]),
    }


def make_executor_params(key, hidden):
    keys = jax.random.split(key, len(EXEC_HEADS))
    heads = {name: make_linear_params(k, hidden, c)
             for (name, c), k in zip(EXEC_HEADS.items(), keys)}
    return fuse_head_params(heads)


def stack_executors(executors_params):
    """Stack all executors' fused heads so ONE pallas_call evaluates every executor."""
    names = list(executors_params.keys())
    first = executors_params[names[0]]
    return {
        "names": names,
        "w": jnp.stack([executors_params[n]["w"] for n in names], axis=0),  # (E,H,Cp) bf16
        "b": jnp.stack([executors_params[n]["b"] for n in names], axis=0),  # (E,1,Cp) f32
        "slices": first["slices"],
        "c_pad": first["c_pad"],
    }


# ----------------------------------------------------------------------------------
# module-equivalent pieces
# ----------------------------------------------------------------------------------
def coach_forward(coach_params, coach_feat, seed):
    """Coach.sample + sampler.get_log_prob in a single fused pallas_call."""
    B, H = coach_feat.shape
    fused = coach_params["fused"]
    c_pad = fused["c_pad"]
    out_f, out_i = pl.pallas_call(
        coach_params["kernel"],
        out_shape=(jax.ShapeDtypeStruct((B, 128), jnp.float32),
                   jax.ShapeDtypeStruct((B, 128), jnp.int32)),
        grid_spec=pltpu.PrefetchScalarGridSpec(
            num_scalar_prefetch=1, grid=(1,),
            in_specs=[pl.BlockSpec((B, H), lambda i, s: (0, 0)),
                      pl.BlockSpec((H, c_pad), lambda i, s: (0, 0)),
                      pl.BlockSpec((1, c_pad), lambda i, s: (0, 0))],
            out_specs=(pl.BlockSpec((B, 128), lambda i, s: (0, 0)),
                       pl.BlockSpec((B, 128), lambda i, s: (0, 0)))),
        compiler_params=pltpu.CompilerParams(dimension_semantics=("arbitrary",)),
    )(seed, coach_feat, fused["w"], fused["b"])

    NI = coach_params["num_insts"]
    inst_pi = out_f[:, 0:NI]
    cont_pi = out_f[:, NI:NI + 2]
    value = out_f[:, NI + 2:NI + 3]
    old_coach_log_probs = out_f[:, NI + 3] + out_f[:, NI + 4]
    inst = out_i[:, 0]
    cont = out_i[:, 1]
    inst_len = jnp.ones((B,), jnp.int32)

    coach_reply = {
        "inst": inst[:, None], "inst_pi": inst_pi,
        "cont": cont[:, None], "cont_pi": cont_pi,
        "raw_inst": jnp.zeros((B, 1), jnp.int32),
    }
    log_prob_reply = {
        "probs": {"inst_pi": inst_pi, "cont_pi": cont_pi},
        "samples": {"inst": inst, "cont": cont},
        "value": value,
    }
    return inst, inst_len, cont, coach_reply, log_prob_reply, old_coach_log_probs


def executors_forward(exec_stack, coach_params, batch, inst, seeds):
    """format_executor_input + compute_prob + construct_samples/compute_log_prob for ALL
    executors in ONE fused pallas_call over a (executor, batch, unit-tile) grid."""
    unit_feat = batch["unit_feat"]                          # (B, U, H) f32
    B, U, H = unit_feat.shape
    names = exec_stack["names"]
    E = len(names)
    c_pad = exec_stack["c_pad"]
    slices = exec_stack["slices"]
    max_cpad = max(cp for (_, _, _, cp) in slices)

    vmem_limit, tile_cap = _device_tuning()
    tile_u = min(tile_cap, _round_up(U, 8))                 # no forced multi-step grid
    u_pad = _round_up(U, tile_u)
    if u_pad != U:
        unit_feat = jnp.pad(unit_feat, ((0, 0), (0, u_pad - U), (0, 0)))
    inst_emb = coach_params["inst_emb"][inst][:, None, :]   # (B,1,H)  glue gather

    kernel = _make_executor_kernel(
        tuple((off, c, cp) for (_, off, c, cp) in slices), len(slices),
        max_cpad, SAMP_LANES)

    grid = (E, B, u_pad // tile_u)
    probs, samples, logps = pl.pallas_call(
        kernel,
        out_shape=(jax.ShapeDtypeStruct((E, B, u_pad, c_pad), jnp.bfloat16),
                   jax.ShapeDtypeStruct((E, B, u_pad, SAMP_LANES), jnp.int32),
                   jax.ShapeDtypeStruct((E, B, u_pad, SAMP_LANES), jnp.float32)),
        grid_spec=pltpu.PrefetchScalarGridSpec(
            num_scalar_prefetch=1, grid=grid,
            in_specs=[
                pl.BlockSpec((None, tile_u, H), lambda e, b, u, s: (b, u, 0)),
                pl.BlockSpec((None, 1, H), lambda e, b, u, s: (b, 0, 0)),
                # weight/bias blocks only change with the executor index (stay resident
                # across the b/u axes).
                pl.BlockSpec((None, H, c_pad), lambda e, b, u, s: (e, 0, 0)),
                pl.BlockSpec((None, 1, c_pad), lambda e, b, u, s: (e, 0, 0)),
            ],
            out_specs=(
                pl.BlockSpec((None, None, tile_u, c_pad), lambda e, b, u, s: (e, b, u, 0)),
                pl.BlockSpec((None, None, tile_u, SAMP_LANES), lambda e, b, u, s: (e, b, u, 0)),
                pl.BlockSpec((None, None, tile_u, SAMP_LANES), lambda e, b, u, s: (e, b, u, 0)),
            )),
        compiler_params=pltpu.CompilerParams(
            dimension_semantics=("parallel", "parallel", "parallel"),
            vmem_limit_bytes=vmem_limit),
    )(seeds, unit_feat, inst_emb, exec_stack["w"], exec_stack["b"])

    results = {}
    for ei, name in enumerate(names):
        executor_reply, sample_reply, pre_log_probs = {}, {}, {}
        lp_sum = None
        for idx, (hname, off, c, _cp) in enumerate(slices):
            executor_reply[hname] = probs[ei, :, :U, off:off + c].astype(jnp.float32)
            samp = samples[ei, :, :U, idx]
            lp = logps[ei, :, :U, idx]
            sample_reply["sample_" + hname] = samp
            pre_log_probs["log_prob_" + hname] = lp
            lp_sum = lp if lp_sum is None else lp_sum + lp
        results[name] = (executor_reply, sample_reply, pre_log_probs, lp_sum)
    return results


def format_reply(batch, coach_reply, executor_reply):
    reply = dict(coach_reply)
    reply.update(executor_reply)
    reply["num_unit"] = batch["num_army"]
    return reply


def move_to_cpu(obj):
    if hasattr(obj, "dtype"):
        return jax.device_get(obj)
    elif isinstance(obj, dict):
        return {k: move_to_cpu(v) for k, v in obj.items()}
    elif isinstance(obj, list):
        return [move_to_cpu(v) for v in obj]
    else:
        raise TypeError("Invalid type for move_to")


def _one_hot_reply(executor_reply, sample_reply):
    return {k: jax.nn.one_hot(sample_reply["sample_" + k], v.shape[-1], dtype=v.dtype)
            for k, v in executor_reply.items()}


# ----------------------------------------------------------------------------------
# MultiExecutorWrapper.forward
# ----------------------------------------------------------------------------------
def multi_executor_forward(coach_params, exec_stack, batch, key, exec_sample=True):
    replies_dev = {}
    names = exec_stack["names"]
    E = len(names)
    seeds = jax.random.randint(key, (1 + E,), 0, 2 ** 31 - 1, dtype=jnp.int32)

    # ---- coach (1 fused kernel) ----
    (inst, inst_len, inst_cont, coach_reply,
     log_prob_reply, old_coach_log_probs) = coach_forward(
        coach_params, batch["coach_feat"], seeds[0:1])
    replies_dev["bc_coach"] = coach_reply

    # ---- ALL executors in one fused kernel (same formatted input for every executor) ----
    exec_results = executors_forward(exec_stack, coach_params, batch, inst, seeds[1:1 + E])

    executor_reply, sample_reply, pre_log_probs, pre_log_prob_sum = exec_results["bc"]
    if exec_sample:
        one_hot_reply = _one_hot_reply(executor_reply, sample_reply)
        batch["log_prob_sum"] = pre_log_prob_sum
        batch.update(pre_log_probs)
        batch.update(one_hot_reply)
        batch.update(sample_reply)
        replies_dev["bc_executor"] = {"one_hot_reply": one_hot_reply,
                                      "executor_reply": executor_reply}
        executor_reply_main = one_hot_reply
    else:
        executor_reply_main = executor_reply

    main_reply = format_reply(batch, coach_reply, executor_reply_main)
    batch.update(main_reply)
    batch["e_inst"] = inst
    batch["e_inst_len"] = inst_len
    batch["e_inst_cont"] = inst_cont
    batch["old_coach_log_probs"] = jax.lax.stop_gradient(old_coach_log_probs)

    # ---- remaining executors: thin slices of the already-computed fused outputs ----
    for name in names:
        if name == "bc":
            continue
        reply_k, samples_k, _, _ = exec_results[name]
        if exec_sample:
            replies_dev[name] = {"one_hot_reply": _one_hot_reply(reply_k, samples_k),
                                 "executor_reply": reply_k}
        else:
            replies_dev[name] = {"executor_reply": reply_k}

    # single deferred host transfer (replaces per-executor device_get syncs)
    replies = move_to_cpu(replies_dev)
    return main_reply, log_prob_reply, replies


# ----------------------------------------------------------------------------------
if __name__ == "__main__":
    B, U, H = 2, 8, 32          # batch, units, hidden
    NUM_INSTS = 32

    root = jax.random.PRNGKey(0)
    k_coach_p, k_bc_p, k_rl_p, k_feat, k_unit, k_fwd = jax.random.split(root, 6)

    coach_params = make_coach_params(k_coach_p, H, NUM_INSTS)
    executors_params = {
        "bc": make_executor_params(k_bc_p, H),
        "rl": make_executor_params(k_rl_p, H),
    }
    exec_stack = stack_executors(executors_params)

    batch = {
        "coach_feat": jax.random.normal(k_feat, (B, H), jnp.float32),
        "unit_feat": jax.random.normal(k_unit, (B, U, H), jnp.float32),
        "num_army": jnp.full((B, 1), U, jnp.int32),
    }

    main_reply, log_prob_reply, replies = multi_executor_forward(
        coach_params, exec_stack, batch, k_fwd, exec_sample=True)

    jax.block_until_ready(main_reply["cmd_type_prob"])
    jax.block_until_ready(log_prob_reply["value"])
    jax.block_until_ready(batch["old_coach_log_probs"])
    jax.block_until_ready(batch["log_prob_sum"])

    # sanity: probs sum to 1 (bf16 + approx-reciprocal tolerance), log-probs finite & <= 0,
    # samples stay inside the real (unpadded) class ranges.
    cmd_probs = replies["bc_executor"]["executor_reply"]["cmd_type_prob"]
    assert np.allclose(np.sum(cmd_probs, axis=-1), 1.0, atol=2e-2)
    inst_pi_sum = np.sum(replies["bc_coach"]["inst_pi"], axis=-1)
    assert np.allclose(inst_pi_sum, 1.0, atol=1e-2)
    lp_sum = jax.device_get(batch["log_prob_sum"])
    assert np.all(np.isfinite(lp_sum)) and np.all(lp_sum <= 1e-4)
    coach_lp = jax.device_get(batch["old_coach_log_probs"])
    assert np.all(np.isfinite(coach_lp)) and np.all(coach_lp <= 1e-4)
    for name, c in EXEC_HEADS.items():
        s = jax.device_get(batch["sample_" + name])
        assert np.all((s >= 0) & (s < c))

    print("KERNEL_OK")
</pallas_src>

<mosaic_0001>
module attributes {stable_mosaic.version = 11 : i64} {
  func.func @kernel(%arg0: i32, %arg1: memref<1xi32, #tpu.memory_space<smem>>, %arg2: memref<2x32xf32, #tpu.memory_space<vmem>>, %arg3: memref<32x384xbf16, #tpu.memory_space<vmem>>, %arg4: memref<1x384xf32, #tpu.memory_space<vmem>>, %arg5: memref<2x128xf32, #tpu.memory_space<vmem>>, %arg6: memref<2x128xi32, #tpu.memory_space<vmem>>) attributes {dimension_semantics = [#tpu.dimension_semantics<arbitrary>], iteration_bounds = array<i64: 1>, scalar_prefetch = 1 : i64, scratch_operands = 0 : i64, tpu.core_type = #tpu.core_type<tc>, window_params = [{pipeline_mode = #tpu.pipeline_mode<synchronous>, transform_indices = @transform_0, window_bounds = array<i64: 2, 32>}, {pipeline_mode = #tpu.pipeline_mode<synchronous>, transform_indices = @transform_1, window_bounds = array<i64: 32, 384>}, {pipeline_mode = #tpu.pipeline_mode<synchronous>, transform_indices = @transform_2, window_bounds = array<i64: 1, 384>}, {pipeline_mode = #tpu.pipeline_mode<synchronous>, transform_indices = @transform_3, window_bounds = array<i64: 2, 128>}, {pipeline_mode = #tpu.pipeline_mode<synchronous>, transform_indices = @transform_4, window_bounds = array<i64: 2, 128>}]} {
    %c0 = arith.constant 0 : index
    %0 = memref.load %arg1[%c0] : memref<1xi32, #tpu.memory_space<smem>>
    %c0_0 = arith.constant 0 : index
    %c0_1 = arith.constant 0 : index
    %1 = vector.load %arg2[%c0_0, %c0_1] : memref<2x32xf32, #tpu.memory_space<vmem>>, vector<2x32xf32>
    %2 = arith.truncf %1 : vector<2x32xf32> to vector<2x32xbf16>
    %c0_2 = arith.constant 0 : index
    %c0_3 = arith.constant 0 : index
    %3 = vector.load %arg3[%c0_2, %c0_3] : memref<32x384xbf16, #tpu.memory_space<vmem>>, vector<32x384xbf16>
    %cst = arith.constant dense<0.000000e+00> : vector<2x384xf32>
    %4 = tpu.matmul %2, %3, %cst {dimension_numbers = #tpu.dot_dimension_numbers<[1], [0], [0], [1], [0, 0, 1, 1], [], []>} : vector<2x32xbf16>, vector<32x384xbf16>, vector<2x384xf32> -> vector<2x384xf32>
    %c0_4 = arith.constant 0 : index
    %c0_5 = arith.constant 0 : index
    %5 = vector.load %arg4[%c0_4, %c0_5] : memref<1x384xf32, #tpu.memory_space<vmem>>, vector<1x384xf32>
    %6 = vector.broadcast %5 : vector<1x384xf32> to vector<2x384xf32>
    %7 = arith.addf %4, %6 : vector<2x384xf32>
    %8 = tpu.iota {dimensions = array<i32: 0>} : vector<2x1xi32>
    %9 = vector.extract_strided_slice %7 {offsets = [0, 0], sizes = [2, 128], strides = [1, 1]} : vector<2x384xf32> to vector<2x128xf32>
    %cst_6 = arith.constant dense<0xFF800000> : vector<2xf32>
    %10 = vector.multi_reduction <maximumf>, %9, %cst_6 [1] : vector<2x128xf32> to vector<2xf32>
    %11 = vector.shape_cast %10 : vector<2xf32> to vector<2x1xf32>
    %12 = vector.broadcast %11 : vector<2x1xf32> to vector<2x128xf32>
    %13 = arith.subf %9, %12 : vector<2x128xf32>
    %14 = math.exp %13 : vector<2x128xf32>
    %cst_7 = arith.constant dense<0.000000e+00> : vector<2xf32>
    %15 = vector.multi_reduction <add>, %14, %cst_7 [1] : vector<2x128xf32> to vector<2xf32>
    %16 = vector.shape_cast %15 : vector<2xf32> to vector<2x1xf32>
    %cst_8 = arith.constant 1.000000e+00 : f32
    %17 = vector.broadcast %cst_8 : f32 to vector<2x1xf32>
    %18 = arith.divf %17, %16 : vector<2x1xf32>
    %19 = vector.broadcast %18 : vector<2x1xf32> to vector<2x128xf32>
    %20 = arith.mulf %14, %19 : vector<2x128xf32>
    %21 = tpu.iota {dimensions = array<i32: 1>} : vector<2x128xi32>
    %c2_i32 = arith.constant 2 : i32
    %22 = vector.broadcast %c2_i32 : i32 to vector<2x1xi32>
    %23 = arith.muli %8, %22 : vector<2x1xi32>
    %c0_i32 = arith.constant 0 : i32
    %24 = vector.broadcast %c0_i32 : i32 to vector<2x1xi32>
    %25 = arith.addi %23, %24 : vector<2x1xi32>
    %c128_i32 = arith.constant 128 : i32
    %26 = vector.broadcast %c128_i32 : i32 to vector<2x1xi32>
    %27 = arith.muli %25, %26 : vector<2x1xi32>
    %28 = vector.broadcast %27 : vector<2x1xi32> to vector<2x128xi32>
    %29 = arith.addi %28, %21 : vector<2x128xi32>
    %c-1640531535_i32 = arith.constant -1640531535 : i32
    %30 = vector.broadcast %c-1640531535_i32 : i32 to vector<2x128xi32>
    %31 = arith.muli %29, %30 : vector<2x128xi32>
    %32 = vector.broadcast %0 : i32 to vector<2x128xi32>
    %33 = arith.addi %31, %32 : vector<2x128xi32>
    %c16_i32 = arith.constant 16 : i32
    %34 = vector.broadcast %c16_i32 : i32 to vector<2x128xi32>
    %35 = arith.shrsi %33, %34 : vector<2x128xi32>
    %c65535_i32 = arith.constant 65535 : i32
    %36 = vector.broadcast %c65535_i32 : i32 to vector<2x128xi32>
    %37 = arith.andi %35, %36 : vector<2x128xi32>
    %38 = arith.xori %33, %37 : vector<2x128xi32>
    %c-2048144789_i32 = arith.constant -2048144789 : i32
    %39 = vector.broadcast %c-2048144789_i32 : i32 to vector<2x128xi32>
    %40 = arith.muli %38, %39 : vector<2x128xi32>
    %c13_i32 = arith.constant 13 : i32
    %41 = vector.broadcast %c13_i32 : i32 to vector<2x128xi32>
    %42 = arith.shrsi %40, %41 : vector<2x128xi32>
    %c524287_i32 = arith.constant 524287 : i32
    %43 = vector.broadcast %c524287_i32 : i32 to vector<2x128xi32>
    %44 = arith.andi %42, %43 : vector<2x128xi32>
    %45 = arith.xori %40, %44 : vector<2x128xi32>
    %c-1028477387_i32 = arith.constant -1028477387 : i32
    %46 = vector.broadcast %c-1028477387_i32 : i32 to vector<2x128xi32>
    %47 = arith.muli %45, %46 : vector<2x128xi32>
    %c16_i32_9 = arith.constant 16 : i32
    %48 = vector.broadcast %c16_i32_9 : i32 to vector<2x128xi32>
    %49 = arith.shrsi %47, %48 : vector<2x128xi32>
    %c65535_i32_10 = arith.constant 65535 : i32
    %50 = vector.broadcast %c65535_i32_10 : i32 to vector<2x128xi32>
    %51 = arith.andi %49, %50 : vector<2x128xi32>
    %52 = arith.xori %47, %51 : vector<2x128xi32>
    %c8388607_i32 = arith.constant 8388607 : i32
    %53 = vector.broadcast %c8388607_i32 : i32 to vector<2x128xi32>
    %54 = arith.andi %52, %53 : vector<2x128xi32>
    %c1065353216_i32 = arith.constant 1065353216 : i32
    %55 = vector.broadcast %c1065353216_i32 : i32 to vector<2x128xi32>
    %56 = arith.ori %54, %55 : vector<2x128xi32>
    %57 = tpu.bitcast %56 : vector<2x128xi32> -> vector<2x128xf32>
    %cst_11 = arith.constant 1.000000e+00 : f32
    %58 = vector.broadcast %cst_11 : f32 to vector<2x128xf32>
    %59 = arith.subf %57, %58 : vector<2x128xf32>
    %cst_12 = arith.constant 9.99999996E-13 : f32
    %60 = vector.broadcast %cst_12 : f32 to vector<2x128xf32>
    %61 = arith.maximumf %59, %60 : vector<2x128xf32>
    %62 = math.log %61 : vector<2x128xf32>
    %cst_13 = arith.constant 0.000000e+00 : f32
    %63 = vector.broadcast %cst_13 : f32 to vector<2x128xf32>
    %64 = arith.subf %63, %62 : vector<2x128xf32>
    %cst_14 = arith.constant 1.000000e+00 : f32
    %65 = vector.broadcast %cst_14 : f32 to vector<2x128xf32>
    %66 = arith.divf %65, %64 : vector<2x128xf32>
    %67 = arith.mulf %14, %66 : vector<2x128xf32>
    %cst_15 = arith.constant dense<0xFF800000> : vector<2xf32>
    %68 = vector.multi_reduction <maximumf>, %67, %cst_15 [1] : vector<2x128xf32> to vector<2xf32>
    %69 = vector.shape_cast %68 : vector<2xf32> to vector<2x1xf32>
    %70 = vector.broadcast %69 : vector<2x1xf32> to vector<2x128xf32>
    %71 = arith.cmpf oge, %67, %70 : vector<2x128xf32>
    %c128_i32_16 = arith.constant 128 : i32
    %72 = vector.broadcast %c128_i32_16 : i32 to vector<2x128xi32>
    %73 = arith.select %71, %21, %72 : vector<2x128xi1>, vector<2x128xi32>
    %cst_17 = arith.constant dense<2147483647> : vector<2xi32>
    %74 = vector.multi_reduction <minsi>, %73, %cst_17 [1] : vector<2x128xi32> to vector<2xi32>
    %75 = vector.shape_cast %74 : vector<2xi32> to vector<2x1xi32>
    %cst_18 = arith.constant -1.000000e+30 : f32
    %76 = vector.broadcast %cst_18 : f32 to vector<2x128xf32>
    %77 = arith.select %71, %9, %76 : vector<2x128xi1>, vector<2x128xf32>
    %cst_19 = arith.constant dense<0xFF800000> : vector<2xf32>
    %78 = vector.multi_reduction <maximumf>, %77, %cst_19 [1] : vector<2x128xf32> to vector<2xf32>
    %79 = vector.shape_cast %78 : vector<2xf32> to vector<2x1xf32>
    %80 = arith.subf %79, %11 : vector<2x1xf32>
    %81 = math.log %16 : vector<2x1xf32>
    %82 = arith.subf %80, %81 : vector<2x1xf32>
    %83 = vector.extract_strided_slice %7 {offsets = [0, 128], sizes = [2, 128], strides = [1, 1]} : vector<2x384xf32> to vector<2x128xf32>
    %cst_20 = arith.constant dense<0xFF800000> : vector<2xf32>
    %84 = vector.multi_reduction <maximumf>, %83, %cst_20 [1] : vector<2x128xf32> to vector<2xf32>
    %85 = vector.shape_cast %84 : vector<2xf32> to vector<2x1xf32>
    %86 = vector.broadcast %85 : vector<2x1xf32> to vector<2x128xf32>
    %87 = arith.subf %83, %86 : vector<2x128xf32>
    %88 = math.exp %87 : vector<2x128xf32>
    %cst_21 = arith.constant dense<0.000000e+00> : vector<2xf32>
    %89 = vector.multi_reduction <add>, %88, %cst_21 [1] : vector<2x128xf32> to vector<2xf32>
    %90 = vector.shape_cast %89 : vector<2xf32> to vector<2x1xf32>
    %cst_22 = arith.constant 1.000000e+00 : f32
    %91 = vector.broadcast %cst_22 : f32 to vector<2x1xf32>
    %92 = arith.divf %91, %90 : vector<2x1xf32>
    %93 = vector.broadcast %92 : vector<2x1xf32> to vector<2x128xf32>
    %94 = arith.mulf %88, %93 : vector<2x128xf32>
    %95 = tpu.iota {dimensions = array<i32: 1>} : vector<2x128xi32>
    %c2_i32_23 = arith.constant 2 : i32
    %96 = vector.broadcast %c2_i32_23 : i32 to vector<2x1xi32>
    %97 = arith.muli %8, %96 : vector<2x1xi32>
    %c1_i32 = arith.constant 1 : i32
    %98 = vector.broadcast %c1_i32 : i32 to vector<2x1xi32>
    %99 = arith.addi %97, %98 : vector<2x1xi32>
    %c128_i32_24 = arith.constant 128 : i32
    %100 = vector.broadcast %c128_i32_24 : i32 to vector<2x1xi32>
    %101 = arith.muli %99, %100 : vector<2x1xi32>
    %102 = vector.broadcast %101 : vector<2x1xi32> to vector<2x128xi32>
    %103 = arith.addi %102, %95 : vector<2x128xi32>
    %c-1640531535_i32_25 = arith.constant -1640531535 : i32
    %104 = vector.broadcast %c-1640531535_i32_25 : i32 to vector<2x128xi32>
    %105 = arith.muli %103, %104 : vector<2x128xi32>
    %106 = vector.broadcast %0 : i32 to vector<2x128xi32>
    %107 = arith.addi %105, %106 : vector<2x128xi32>
    %c16_i32_26 = arith.constant 16 : i32
    %108 = vector.broadcast %c16_i32_26 : i32 to vector<2x128xi32>
    %109 = arith.shrsi %107, %108 : vector<2x128xi32>
    %c65535_i32_27 = arith.constant 65535 : i32
    %110 = vector.broadcast %c65535_i32_27 : i32 to vector<2x128xi32>
    %111 = arith.andi %109, %110 : vector<2x128xi32>
    %112 = arith.xori %107, %111 : vector<2x128xi32>
    %c-2048144789_i32_28 = arith.constant -2048144789 : i32
    %113 = vector.broadcast %c-2048144789_i32_28 : i32 to vector<2x128xi32>
    %114 = arith.muli %112, %113 : vector<2x128xi32>
    %c13_i32_29 = arith.constant 13 : i32
    %115 = vector.broadcast %c13_i32_29 : i32 to vector<2x128xi32>
    %116 = arith.shrsi %114, %115 : vector<2x128xi32>
    %c524287_i32_30 = arith.constant 524287 : i32
    %117 = vector.broadcast %c524287_i32_30 : i32 to vector<2x128xi32>
    %118 = arith.andi %116, %117 : vector<2x128xi32>
    %119 = arith.xori %114, %118 : vector<2x128xi32>
    %c-1028477387_i32_31 = arith.constant -1028477387 : i32
    %120 = vector.broadcast %c-1028477387_i32_31 : i32 to vector<2x128xi32>
    %121 = arith.muli %119, %120 : vector<2x128xi32>
    %c16_i32_32 = arith.constant 16 : i32
    %122 = vector.broadcast %c16_i32_32 : i32 to vector<2x128xi32>
    %123 = arith.shrsi %121, %122 : vector<2x128xi32>
    %c65535_i32_33 = arith.constant 65535 : i32
    %124 = vector.broadcast %c65535_i32_33 : i32 to vector<2x128xi32>
    %125 = arith.andi %123, %124 : vector<2x128xi32>
    %126 = arith.xori %121, %125 : vector<2x128xi32>
    %c8388607_i32_34 = arith.constant 8388607 : i32
    %127 = vector.broadcast %c8388607_i32_34 : i32 to vector<2x128xi32>
    %128 = arith.andi %126, %127 : vector<2x128xi32>
    %c1065353216_i32_35 = arith.constant 1065353216 : i32
    %129 = vector.broadcast %c1065353216_i32_35 : i32 to vector<2x128xi32>
    %130 = arith.ori %128, %129 : vector<2x128xi32>
    %131 = tpu.bitcast %130 : vector<2x128xi32> -> vector<2x128xf32>
    %cst_36 = arith.constant 1.000000e+00 : f32
    %132 = vector.broadcast %cst_36 : f32 to vector<2x128xf32>
    %133 = arith.subf %131, %132 : vector<2x128xf32>
    %cst_37 = arith.constant 9.99999996E-13 : f32
    %134 = vector.broadcast %cst_37 : f32 to vector<2x128xf32>
    %135 = arith.maximumf %133, %134 : vector<2x128xf32>
    %136 = math.log %135 : vector<2x128xf32>
    %cst_38 = arith.constant 0.000000e+00 : f32
    %137 = vector.broadcast %cst_38 : f32 to vector<2x128xf32>
    %138 = arith.subf %137, %136 : vector<2x128xf32>
    %cst_39 = arith.constant 1.000000e+00 : f32
    %139 = vector.broadcast %cst_39 : f32 to vector<2x128xf32>
    %140 = arith.divf %139, %138 : vector<2x128xf32>
    %141 = arith.mulf %88, %140 : vector<2x128xf32>
    %cst_40 = arith.constant dense<0xFF800000> : vector<2xf32>
    %142 = vector.multi_reduction <maximumf>, %141, %cst_40 [1] : vector<2x128xf32> to vector<2xf32>
    %143 = vector.shape_cast %142 : vector<2xf32> to vector<2x1xf32>
    %144 = vector.broadcast %143 : vector<2x1xf32> to vector<2x128xf32>
    %145 = arith.cmpf oge, %141, %144 : vector<2x128xf32>
    %c128_i32_41 = arith.constant 128 : i32
    %146 = vector.broadcast %c128_i32_41 : i32 to vector<2x128xi32>
    %147 = arith.select %145, %95, %146 : vector<2x128xi1>, vector<2x128xi32>
    %cst_42 = arith.constant dense<2147483647> : vector<2xi32>
    %148 = vector.multi_reduction <minsi>, %147, %cst_42 [1] : vector<2x128xi32> to vector<2xi32>
    %149 = vector.shape_cast %148 : vector<2xi32> to vector<2x1xi32>
    %cst_43 = arith.constant -1.000000e+30 : f32
    %150 = vector.broadcast %cst_43 : f32 to vector<2x128xf32>
    %151 = arith.select %145, %83, %150 : vector<2x128xi1>, vector<2x128xf32>
    %cst_44 = arith.constant dense<0xFF800000> : vector<2xf32>
    %152 = vector.multi_reduction <maximumf>, %151, %cst_44 [1] : vector<2x128xf32> to vector<2xf32>
    %153 = vector.shape_cast %152 : vector<2xf32> to vector<2x1xf32>
    %154 = arith.subf %153, %85 : vector<2x1xf32>
    %155 = math.log %90 : vector<2x1xf32>
    %156 = arith.subf %154, %155 : vector<2x1xf32>
    %157 = vector.extract_strided_slice %7 {offsets = [0, 256], sizes = [2, 1], strides = [1, 1]} : vector<2x384xf32> to vector<2x1xf32>
    %158 = tpu.iota {dimensions = array<i32: 1>} : vector<2x128xi32>
    %c32_i32 = arith.constant 32 : i32
    %159 = vector.broadcast %c32_i32 : i32 to vector<2x128xi32>
    %160 = arith.cmpi slt, %158, %159 : vector<2x128xi32>
    %cst_45 = arith.constant 0.000000e+00 : f32
    %161 = vector.broadcast %cst_45 : f32 to vector<2x128xf32>
    %162 = arith.select %160, %20, %161 : vector<2x128xi1>, vector<2x128xf32>
    %c32_i32_46 = arith.constant 32 : i32
    %163 = vector.broadcast %c32_i32_46 : i32 to vector<2x128xi32>
    %164 = arith.cmpi eq, %158, %163 : vector<2x128xi32>
    %165 = vector.extract_strided_slice %94 {offsets = [0, 0], sizes = [2, 1], strides = [1, 1]} : vector<2x128xf32> to vector<2x1xf32>
    %166 = vector.shape_cast %165 : vector<2x1xf32> to vector<2x1xf32>
    %167 = vector.broadcast %166 : vector<2x1xf32> to vector<2x128xf32>
    %168 = arith.select %164, %167, %162 : vector<2x128xi1>, vector<2x128xf32>
    %c33_i32 = arith.constant 33 : i32
    %169 = vector.broadcast %c33_i32 : i32 to vector<2x128xi32>
    %170 = arith.cmpi eq, %158, %169 : vector<2x128xi32>
    %171 = vector.extract_strided_slice %94 {offsets = [0, 1], sizes = [2, 1], strides = [1, 1]} : vector<2x128xf32> to vector<2x1xf32>
    %172 = vector.shape_cast %171 : vector<2x1xf32> to vector<2x1xf32>
    %173 = vector.broadcast %172 : vector<2x1xf32> to vector<2x128xf32>
    %174 = arith.select %170, %173, %168 : vector<2x128xi1>, vector<2x128xf32>
    %c34_i32 = arith.constant 34 : i32
    %175 = vector.broadcast %c34_i32 : i32 to vector<2x128xi32>
    %176 = arith.cmpi eq, %158, %175 : vector<2x128xi32>
    %177 = vector.shape_cast %157 : vector<2x1xf32> to vector<2x1xf32>
    %178 = vector.broadcast %177 : vector<2x1xf32> to vector<2x128xf32>
    %179 = arith.select %176, %178, %174 : vector<2x128xi1>, vector<2x128xf32>
    %c35_i32 = arith.constant 35 : i32
    %180 = vector.broadcast %c35_i32 : i32 to vector<2x128xi32>
    %181 = arith.cmpi eq, %158, %180 : vector<2x128xi32>
    %182 = vector.shape_cast %82 : vector<2x1xf32> to vector<2x1xf32>
    %183 = vector.broadcast %182 : vector<2x1xf32> to vector<2x128xf32>
    %184 = arith.select %181, %183, %179 : vector<2x128xi1>, vector<2x128xf32>
    %c36_i32 = arith.constant 36 : i32
    %185 = vector.broadcast %c36_i32 : i32 to vector<2x128xi32>
    %186 = arith.cmpi eq, %158, %185 : vector<2x128xi32>
    %187 = vector.shape_cast %156 : vector<2x1xf32> to vector<2x1xf32>
    %188 = vector.broadcast %187 : vector<2x1xf32> to vector<2x128xf32>
    %189 = arith.select %186, %188, %184 : vector<2x128xi1>, vector<2x128xf32>
    %c0_47 = arith.constant 0 : index
    %c0_48 = arith.constant 0 : index
    %190 = vector.load %arg5[%c0_47, %c0_48] : memref<2x128xf32, #tpu.memory_space<vmem>>, vector<2x128xf32>
    tpu.vector_store %arg5[%c0_47, %c0_48], %189 {strides = array<i32>} : memref<2x128xf32, #tpu.memory_space<vmem>>, vector<2x128xf32>,
    %c0_i32_49 = arith.constant 0 : i32
    %191 = vector.broadcast %c0_i32_49 : i32 to vector<2x128xi32>
    %192 = arith.cmpi eq, %158, %191 : vector<2x128xi32>
    %c0_i32_50 = arith.constant 0 : i32
    %193 = vector.shape_cast %75 : vector<2x1xi32> to vector<2x1xi32>
    %194 = vector.broadcast %193 : vector<2x1xi32> to vector<2x128xi32>
    %195 = vector.broadcast %c0_i32_50 : i32 to vector<2x128xi32>
    %196 = arith.select %192, %194, %195 : vector<2x128xi1>, vector<2x128xi32>
    %c1_i32_51 = arith.constant 1 : i32
    %197 = vector.broadcast %c1_i32_51 : i32 to vector<2x128xi32>
    %198 = arith.cmpi eq, %158, %197 : vector<2x128xi32>
    %199 = vector.shape_cast %149 : vector<2x1xi32> to vector<2x1xi32>
    %200 = vector.broadcast %199 : vector<2x1xi32> to vector<2x128xi32>
    %201 = arith.select %198, %200, %196 : vector<2x128xi1>, vector<2x128xi32>
    %c0_52 = arith.constant 0 : index
    %c0_53 = arith.constant 0 : index
    %202 = vector.load %arg6[%c0_52, %c0_53] : memref<2x128xi32, #tpu.memory_space<vmem>>, vector<2x128xi32>
    tpu.vector_store %arg6[%c0_52, %c0_53], %201 {strides = array<i32>} : memref<2x128xi32, #tpu.memory_space<vmem>>, vector<2x128xi32>,
    return
  }
  func.func @transform_0(%arg0: i32, %arg1: memref<1xi32, #tpu.memory_space<smem>>) -> (i32, i32) {
    %c0_i32 = arith.constant 0 : i32
    %c0_i32_0 = arith.constant 0 : i32
    %c0_i32_1 = arith.constant 0 : i32
    return %c0_i32, %c0_i32_0 : i32, i32
  }
  func.func @transform_1(%arg0: i32, %arg1: memref<1xi32, #tpu.memory_space<smem>>) -> (i32, i32) {
    %c0_i32 = arith.constant 0 : i32
    %c0_i32_0 = arith.constant 0 : i32
    %c0_i32_1 = arith.constant 0 : i32
    return %c0_i32, %c0_i32_0 : i32, i32
  }
  func.func @transform_2(%arg0: i32, %arg1: memref<1xi32, #tpu.memory_space<smem>>) -> (i32, i32) {
    %c0_i32 = arith.constant 0 : i32
    %c0_i32_0 = arith.constant 0 : i32
    %c0_i32_1 = arith.constant 0 : i32
    return %c0_i32, %c0_i32_0 : i32, i32
  }
  func.func @transform_3(%arg0: i32, %arg1: memref<1xi32, #tpu.memory_space<smem>>) -> (i32, i32) {
    %c0_i32 = arith.constant 0 : i32
    %c0_i32_0 = arith.constant 0 : i32
    %c0_i32_1 = arith.constant 0 : i32
    return %c0_i32, %c0_i32_0 : i32, i32
  }
  func.func @transform_4(%arg0: i32, %arg1: memref<1xi32, #tpu.memory_space<smem>>) -> (i32, i32) {
    %c0_i32 = arith.constant 0 : i32
    %c0_i32_0 = arith.constant 0 : i32
    %c0_i32_1 = arith.constant 0 : i32
    return %c0_i32, %c0_i32_0 : i32, i32
  }
}

</mosaic_0001>

<llo_original>
// kernel: tpu_custom_call.1
$region0: #{tpu_custom_call.1}
  #allocation0 [shape = 'u32[]', space=smem, size = 0x4, offset = 0x4, fixed_abs, tag = 'smem constant byte address 0x4 - core index']
  #allocation1 [shape = 'u32[144,128]{1,0:T(1,128)}', space=vmem, size = 0x12000, scoped, tag = 'internal scratch']
  #allocation2 [shape = 's32[1]{0}', space=sflag, size = 0x4, scoped, tag = 'scoped memory for tpu_custom_call.1']
  #allocation3 [shape = 's32[1]{0:T(128)S(6)}', space=smem, size = 0x200, scoped, tag = 'prefetched SMEM operand 0']
  %s0 = inlined_call_operand.<no memory space> [shape: s32[1], index: 0, kind: input, shape index: {}]
  %s1 = inlined_call_operand.vmem [shape: f32[2,32], index: 1, kind: input, shape index: {}]
  %s2 = inlined_call_operand.hbm [shape: bf16[32,384], index: 2, kind: input, shape index: {}]
  %s3 = inlined_call_operand.vmem [shape: f32[1,384], index: 3, kind: input, shape index: {}]
  %s4 = inlined_call_operand.hbm [shape: f32[2,128], index: 4, kind: output, shape index: {0}]
  %s5 = inlined_call_operand.hbm [shape: s32[2,128], index: 5, kind: output, shape index: {1}]
  %6 = xla_tuple %s4, %s5
  %s7 = sld [smem:[#allocation0]]
  $region34: #{tpu_custom_call.1} parent=0
    _
  %s9 = ssub.s32 1, %s7
  %s10 = scalar_select 0, %s9, %s7
  %11 = sst [smem:[#allocation3]] %s0
  $region1: #{tpu_custom_call.1} parent=0
    #allocation4 [shape = 'u8[24576]{0}', space=vmem, size = 0x6000, scoped, tag = 'input window, operand 2, single buffered']
    #allocation5 [shape = 's32[1]{0}', space=sflag, size = 0x4, scoped, tag = 'scoped memory for tpu_custom_call.1']
    #allocation6 [shape = 's32[1]{0}', space=sflag, size = 0x4, scoped, tag = 'scoped memory for tpu_custom_call.1']
    #allocation7 [shape = 'u8[1024]{0}', space=vmem, size = 0x400, scoped, tag = 'output window, operand 0, single buffered']
    #allocation8 [shape = 'u8[1024]{0}', space=vmem, size = 0x400, scoped, tag = 'output window, operand 1, single buffered']
    #allocation9 [shape = 's32[1]{0}', space=sflag, size = 0x4, scoped, tag = 'scoped memory for tpu_custom_call.1']
    %12 = vsyncpa [#allocation5], 0
    %13 = vsyncpa [#allocation6], 0
    %14 = vsyncpa [#allocation9], 0
    // Predicated region
    $region2: #{tpu_custom_call.1} parent=1 // pred_check
      _
    $region3: #{tpu_custom_call.1} parent=1 // pred_check_branch
      %16 = sbr.rel (0) target = $region5
    $region4: #{tpu_custom_call.1} parent=1 // pred_region
      _
    $region5: #{tpu_custom_call.1} parent=1 // pred_fallthru
      _
    // Predicated region
    $region6: #{tpu_custom_call.1} parent=1 // pred_check
      _
    $region7: #{tpu_custom_call.1} parent=1 // pred_check_branch
      %18 = sbr.rel (0) target = $region9
    $region8: #{tpu_custom_call.1} parent=1 // pred_region
      %s20 = ssub.s32 768, 768
      %21 = vsyncadd [#allocation5], %s20
      %s22 = sshll.u32 [#allocation4], 4
      %s23 = int_to_ptr.vmem [resolvable:$true] %s22
      %28 = dma.hbm_to_vmem [thread:$0]  %s2, 768, %s23, [#allocation5], 192, 192, 12
    $region9: #{tpu_custom_call.1} parent=1 // pred_fallthru
      _
    // Predicated region
    $region10: #{tpu_custom_call.1} parent=1 // pred_check
      _
    $region11: #{tpu_custom_call.1} parent=1 // pred_check_branch
      %30 = sbr.rel (0) target = $region13
    $region12: #{tpu_custom_call.1} parent=1 // pred_region
      _
    $region13: #{tpu_custom_call.1} parent=1 // pred_fallthru
      _
    // Predicated region
    $region14: #{tpu_custom_call.1} parent=1 // pred_check
      _
    $region15: #{tpu_custom_call.1} parent=1 // pred_check_branch
      %32 = sbr.rel (0) target = $region17
    $region16: #{tpu_custom_call.1} parent=1 // pred_region
      %33 = dma.done [#allocation5], 768
    $region17: #{tpu_custom_call.1} parent=1 // pred_fallthru
      _
    %s35 = sld [smem:[#allocation3]]
    %v36 = vld [vmem:[%s1] sm:$0x3]
    %v37 = vpack.c.bf16 %v36, %v36
    %v38 = vld [vmem:[#allocation4] sm:$0xff]
    %v39 = vld [vmem:[#allocation4 + $0x8] sm:$0xf]
    %v40 = vld [vmem:[#allocation4 + $0xc] sm:$0xff]
    %v41 = vld [vmem:[#allocation4 + $0x14] sm:$0xf]
    %v42 = vld [vmem:[#allocation4 + $0x18] sm:$0xff]
    %v43 = vld [vmem:[#allocation4 + $0x20] sm:$0xf]
    %v44 = vld [vmem:[#allocation4 + $0x24] sm:$0xff]
    %v45 = vld [vmem:[#allocation4 + $0x2c] sm:$0xf]
    %v46 = vld [vmem:[%s3] sm:$0x7]
    %v48 = vlaneseq
    %v49 = vshrl.u32 %v48, 7
    %v50 = vsub.s32 0, %v49
    %v51 = vrot.slane %v46, %v50
    %v52 = vlaneseq
    %v53 = vshrl.u32 %v52, 7
    %v54 = vsub.s32 1, %v53
    %v55 = vrot.slane %v46, %v54
    %v56 = vlaneseq
    %v57 = vshrl.u32 %v56, 7
    %v58 = vsub.s32 2, %v57
    %v59 = vrot.slane %v46, %v58
    %v71 = vunpack.c.l.b16 %v38
    %v72 = vunpack.c.h.b16 %v38
    %v73 = vunpack.c.l.b16 %v39
    %v74 = vunpack.c.l.b16 %v40
    %v75 = vunpack.c.h.b16 %v40
    %v76 = vunpack.c.l.b16 %v41
    %v77 = vunpack.c.l.b16 %v42
    %v78 = vunpack.c.h.b16 %v42
    %v79 = vunpack.c.l.b16 %v43
    %v80 = vunpack.c.l.b16 %v44
    %v81 = vunpack.c.h.b16 %v44
    %v82 = vunpack.c.l.b16 %v45
    %v83 = vpack.c.b16 %v74, %v71
    %v84 = vpack.c.b16 %v75, %v72
    %v85 = vpack.c.b16 %v76, %v73
    %v86 = vpack.c.b16 %v80, %v77
    %v87 = vpack.c.b16 %v81, %v78
    %v88 = vpack.c.b16 %v82, %v79
    %vm95 = vcmask 261120
    %v97 = vsel %vm95, %v37, 0
    %99 = vmatprep.subr.bf16.mxu0 0
    %100 = vmatpush1.bf16.msra.mxu0 0
    %101 = vmatprep.subr.bf16.mxu0 0
    %102 = vmatpush1.bf16.msra.mxu0 0
    %103 = vmatprep.subr.bf16.mxu0 0
    %104 = vmatpush1.bf16.msra.mxu0 0
    %105 = vmatprep.subr.bf16.mxu0 0
    %106 = vmatpush1.bf16.msra.mxu0 0
    %107 = vmatprep.subr.bf16.mxu0 0
    %108 = vmatpush1.bf16.msra.mxu0 0
    %109 = vmatprep.subr.bf16.mxu0 0
    %110 = vmatpush1.bf16.msra.mxu0 0
    %111 = vmatprep.subr.bf16.mxu0 %v87
    %112 = vmatpush1.bf16.msra.mxu0 %v86
    %113 = vmatprep.subr.bf16.mxu0 %v84
    %114 = vmatpush1.bf16.msra.mxu0 %v83
    %115 = vmatprep.subr.bf16.mxu0 0
    %116 = vmatpush2.bf16.msra.mxu0 0
    %117 = vmatprep.subr.bf16.mxu0 0
    %118 = vmatpush2.bf16.msra.mxu0 0
    %119 = vmatprep.subr.bf16.mxu0 0
    %120 = vmatpush2.bf16.msra.mxu0 0
    %121 = vmatprep.subr.bf16.mxu0 0
    %122 = vmatpush2.bf16.msra.mxu0 0
    %123 = vmatprep.subr.bf16.mxu0 0
    %124 = vmatpush2.bf16.msra.mxu0 0
    %125 = vmatprep.subr.bf16.mxu0 0
    %126 = vmatpush2.bf16.msra.mxu0 0
    %127 = vmatprep.subr.bf16.mxu0 0
    %128 = vmatpush2.bf16.msra.mxu0 0
    %129 = vmatprep.subr.bf16.mxu0 0
    %130 = vmatpush2.bf16.msra.mxu0 0
    %131 = vmatprep.mubr.bf16.mxu0 0
    %132 = vmatmul.mubr.bf16.gmra.mxu0 %v97
    %v133 = vpop.f32.mrf.mxu0
    %v134 = vadd.f32 %v51, %v133
    %v135 = vpop.f32.mrf.mxu0
    %v136 = vadd.f32 %v55, %v135
    %v137 = vpop.f32.mrf.mxu0
    %v138 = vpop.f32.mrf.mxu0
    %139 = vdwg.mxu0
    %140 = vmatprep.subr.bf16.mxu0 0
    %141 = vmatpush1.bf16.msra.mxu0 0
    %142 = vmatprep.subr.bf16.mxu0 0
    %143 = vmatpush1.bf16.msra.mxu0 0
    %144 = vmatprep.subr.bf16.mxu0 0
    %145 = vmatpush1.bf16.msra.mxu0 0
    %146 = vmatprep.subr.bf16.mxu0 0
    %147 = vmatpush1.bf16.msra.mxu0 0
    %148 = vmatprep.subr.bf16.mxu0 0
    %149 = vmatpush1.bf16.msra.mxu0 0
    %150 = vmatprep.subr.bf16.mxu0 0
    %151 = vmatpush1.bf16.msra.mxu0 0
    %152 = vmatprep.subr.bf16.mxu0 0
    %153 = vmatpush1.bf16.msra.mxu0 %v88
    %154 = vmatprep.subr.bf16.mxu0 0
    %155 = vmatpush1.bf16.msra.mxu0 %v85
    %156 = vmatprep.subr.bf16.mxu0 0
    %157 = vmatpush2.bf16.msra.mxu0 0
    %158 = vmatprep.subr.bf16.mxu0 0
    %159 = vmatpush2.bf16.msra.mxu0 0
    %160 = vmatprep.subr.bf16.mxu0 0
    %161 = vmatpush2.bf16.msra.mxu0 0
    %162 = vmatprep.subr.bf16.mxu0 0
    %163 = vmatpush2.bf16.msra.mxu0 0
    %164 = vmatprep.subr.bf16.mxu0 0
    %165 = vmatpush2.bf16.msra.mxu0 0
    %166 = vmatprep.subr.bf16.mxu0 0
    %167 = vmatpush2.bf16.msra.mxu0 0
    %168 = vmatprep.subr.bf16.mxu0 0
    %169 = vmatpush2.bf16.msra.mxu0 0
    %170 = vmatprep.subr.bf16.mxu0 0
    %171 = vmatpush2.bf16.msra.mxu0 0
    %172 = vmatprep.mubr.bf16.mxu0 0
    %173 = vmatmul.mubr.bf16.gmra.mxu0 %v97
    %v174 = vpop.f32.mrf.mxu0
    %v175 = vadd.f32 %v59, %v174
    %v176 = vpop.f32.mrf.mxu0
    %v177 = vpop.f32.mrf.mxu0
    %v178 = vpop.f32.mrf.mxu0
    %179 = vdwg.mxu0
    %v180 = vlaneseq
    %v181 = vshrl.u32 %v180, 7
    %vm182 = vcmask 1041408
    %v183 = vsel %vm182, %v134, -inf
    %184 = vmax.xlane.f32.xlu0 %v183
    %v185 = vpop.xlane.xlu0 %184
    %v186 = vsub.f32 %v134, %v185
    %v187 = vmul.f32 %v186, 1.442695
    %v188 = vpow.pop %v187
    %v189 = vsel %vm182, %v188, 0.0
    %190 = vadd.xlane.f32.xlu0 %v189
    %v191 = vpop.xlane.xlu0 %190
    %v192 = vrcp.pop %v191
    %v193 = vmul.f32 1.0, %v192
    %v194 = vmul.f32 %v188, %v193
    %v195 = vlaneseq
    %v196 = vand.u32 %v195, 127
    %v197 = vmul.u32 %v181, 2
    %v198 = vmul.u32 %v197, 128
    %v199 = vadd.s32 %v198, %v196
    %v200 = vmul.u32 %v199, 2654435761
    %v201 = vstv %s35
    %v202 = vadd.s32 %v200, %v201
    %v203 = vshra.s32 %v202, 16
    %v204 = vand.u32 %v203, 65535
    %v205 = vxor.u32 %v202, %v204
    %v206 = vmul.u32 %v205, 2246822507
    %v207 = vshra.s32 %v206, 13
    %v208 = vand.u32 %v207, 524287
    %v209 = vxor.u32 %v206, %v208
    %v210 = vmul.u32 %v209, 3266489909
    %v211 = vshra.s32 %v210, 16
    %v212 = vand.u32 %v211, 65535
    %v213 = vxor.u32 %v210, %v212
    %v214 = vand.u32 %v213, 8388607
    %v215 = vor.u32 %v214, 1065353216
    %v217 = vsub.f32 %v215, 1.0
    %v218 = vmax.f32 %v217, 1e-12
    %v219 = vlog2.pop %v218
    %v220 = vmul.f32 %v219, 0.6931472
    %v221 = vsub.f32 0.0, %v220
    %v222 = vrcp.pop %v221
    %v223 = vmul.f32 1.0, %v222
    %v224 = vmul.f32 %v188, %v223
    %v225 = vsel %vm182, %v224, -inf
    %226 = vmax.xlane.f32.xlu0 %v225
    %v227 = vpop.xlane.xlu0 %226
    %vm228 = vcmp.ge.f32.partialorder %v224, %v227
    %v229 = vsel %vm228, %v196, 128
    %v230 = vsel %vm182, %v229, 2147483647
    %v231 = vand.u32 %v230, 65535
    %v232 = vshra.s32 %v230, 16
    %v233 = vcvt.s32.f32 %v231
    %v234 = vcvt.s32.f32 %v232
    %235 = vmin.xlane.f32.xlu0 %v234
    %v236 = vpop.xlane.xlu0 %235
    %vm237 = vcmp.eq.f32.partialorder %v234, %v236
    %v238 = vsel %vm237, %v233, inf
    %239 = vmin.xlane.f32.xlu0 %v238
    %v240 = vpop.xlane.xlu0 %239
    %v241 = vcvt.f32.s32 %v240
    %v242 = vcvt.f32.s32 %v236
    %v243 = vshll.u32 %v242, 16
    %v244 = vadd.s32 %v243, %v241
    %v245 = vsel %vm228, %v134, -1e+30
    %v246 = vsel %vm182, %v245, -inf
    %247 = vmax.xlane.f32.xlu0 %v246
    %v248 = vpop.xlane.xlu0 %247
    %v249 = vsub.f32 %v248, %v185
    %v250 = vlog2.pop %v191
    %v251 = vmul.f32 %v250, 0.6931472
    %v252 = vsub.f32 %v249, %v251
    %v253 = vsel %vm182, %v136, -inf
    %254 = vmax.xlane.f32.xlu0 %v253
    %v255 = vpop.xlane.xlu0 %254
    %v256 = vsub.f32 %v136, %v255
    %v257 = vmul.f32 %v256, 1.442695
    %v258 = vpow.pop %v257
    %v259 = vsel %vm182, %v258, 0.0
    %260 = vadd.xlane.f32.xlu0 %v259
    %v261 = vpop.xlane.xlu0 %260
    %v262 = vrcp.pop %v261
    %v263 = vmul.f32 1.0, %v262
    %v264 = vmul.f32 %v258, %v263
    %v265 = vadd.s32 %v197, 1
    %v266 = vmul.u32 %v265, 128
    %v267 = vadd.s32 %v266, %v196
    %v268 = vmul.u32 %v267, 2654435761
    %v269 = vadd.s32 %v268, %v201
    %v270 = vshra.s32 %v269, 16
    %v271 = vand.u32 %v270, 65535
    %v272 = vxor.u32 %v269, %v271
    %v273 = vmul.u32 %v272, 2246822507
    %v274 = vshra.s32 %v273, 13
    %v275 = vand.u32 %v274, 524287
    %v276 = vxor.u32 %v273, %v275
    %v277 = vmul.u32 %v276, 3266489909
    %v278 = vshra.s32 %v277, 16
    %v279 = vand.u32 %v278, 65535
    %v280 = vxor.u32 %v277, %v279
    %v281 = vand.u32 %v280, 8388607
    %v282 = vor.u32 %v281, 1065353216
    %v284 = vsub.f32 %v282, 1.0
    %v285 = vmax.f32 %v284, 1e-12
    %v286 = vlog2.pop %v285
    %v287 = vmul.f32 %v286, 0.6931472
    %v288 = vsub.f32 0.0, %v287
    %v289 = vrcp.pop %v288
    %v290 = vmul.f32 1.0, %v289
    %v291 = vmul.f32 %v258, %v290
    %v292 = vsel %vm182, %v291, -inf
    %293 = vmax.xlane.f32.xlu0 %v292
    %v294 = vpop.xlane.xlu0 %293
    %vm295 = vcmp.ge.f32.partialorder %v291, %v294
    %v296 = vsel %vm295, %v196, 128
    %v297 = vsel %vm182, %v296, 2147483647
    %v298 = vand.u32 %v297, 65535
    %v299 = vshra.s32 %v297, 16
    %v300 = vcvt.s32.f32 %v298
    %v301 = vcvt.s32.f32 %v299
    %302 = vmin.xlane.f32.xlu0 %v301
    %v303 = vpop.xlane.xlu0 %302
    %vm304 = vcmp.eq.f32.partialorder %v301, %v303
    %v305 = vsel %vm304, %v300, inf
    %306 = vmin.xlane.f32.xlu0 %v305
    %v307 = vpop.xlane.xlu0 %306
    %v308 = vcvt.f32.s32 %v307
    %v309 = vcvt.f32.s32 %v303
    %v310 = vshll.u32 %v309, 16
    %v311 = vadd.s32 %v310, %v308
    %v312 = vsel %vm295, %v136, -1e+30
    %v313 = vsel %vm182, %v312, -inf
    %314 = vmax.xlane.f32.xlu0 %v313
    %v315 = vpop.xlane.xlu0 %314
    %v316 = vsub.f32 %v315, %v255
    %v317 = vlog2.pop %v261
    %v318 = vmul.f32 %v317, 0.6931472
    %v319 = vsub.f32 %v316, %v318
    %vm320 = vcmp.lt.s32.totalorder %v196, 32
    %v321 = vsel %vm320, %v194, 0.0
    %vm322 = vcmp.eq.s32.totalorder %v196, 32
    %324 = vset.pattern.permute.xlu0 0
    %325 = vperm.xlu0 %324, %v264
    %v326 = vpop.permute.xlu0 %325
    %v328 = vsel %vm322, %v326, %v321
    %vm329 = vcmp.eq.s32.totalorder %v196, 33
    %330 = vset.pattern.permute.xlu0 1
    %331 = vperm.xlu0 %330, %v264
    %v332 = vpop.permute.xlu0 %331
    %v334 = vsel %vm329, %v332, %v328
    %vm335 = vcmp.eq.s32.totalorder %v196, 34
    %337 = vset.pattern.permute.xlu0 0
    %338 = vperm.xlu0 %337, %v175
    %v339 = vpop.permute.xlu0 %338
    %v341 = vsel %vm335, %v339, %v334
    %vm342 = vcmp.eq.s32.totalorder %v196, 35
    %v343 = vsel %vm342, %v252, %v341
    %vm344 = vcmp.eq.s32.totalorder %v196, 36
    %v345 = vsel %vm344, %v319, %v343
    %346 = vst [vmem:[#allocation7] sm:$0x3] %v345
    %vm347 = vcmp.eq.s32.totalorder %v196, 0
    %v348 = vsel %vm347, %v244, 0
    %vm349 = vcmp.eq.s32.totalorder %v196, 1
    %v350 = vsel %vm349, %v311, %v348
    %351 = vst [vmem:[#allocation8] sm:$0x3] %v350
    // Predicated region
    $region18: #{tpu_custom_call.1} parent=1 // pred_check
      _
    $region19: #{tpu_custom_call.1} parent=1 // pred_check_branch
      %353 = sbr.rel (0) target = $region21
    $region20: #{tpu_custom_call.1} parent=1 // pred_region
      %s355 = ssub.s32 32, 32
      %356 = vsyncadd [#allocation6], %s355
      %s358 = sshll.u32 [#allocation7], 4
      %s359 = int_to_ptr.vmem [resolvable:$true] %s358
      %361 = dma.vmem_to_hbm [thread:$0]  %s359, 32, %s4, [#allocation6]
    $region21: #{tpu_custom_call.1} parent=1 // pred_fallthru
      _
    // Predicated region
    $region22: #{tpu_custom_call.1} parent=1 // pred_check
      _
    $region23: #{tpu_custom_call.1} parent=1 // pred_check_branch
      %363 = sbr.rel (0) target = $region25
    $region24: #{tpu_custom_call.1} parent=1 // pred_region
      %s365 = ssub.s32 32, 32
      %366 = vsyncadd [#allocation9], %s365
      %s368 = sshll.u32 [#allocation8], 4
      %s369 = int_to_ptr.vmem [resolvable:$true] %s368
      %371 = dma.vmem_to_hbm [thread:$0]  %s369, 32, %s5, [#allocation9]
    $region25: #{tpu_custom_call.1} parent=1 // pred_fallthru
      _
    // Predicated region
    $region26: #{tpu_custom_call.1} parent=1 // pred_check
      _
    $region27: #{tpu_custom_call.1} parent=1 // pred_check_branch
      %373 = sbr.rel (0) target = $region29
    $region28: #{tpu_custom_call.1} parent=1 // pred_region
      %374 = dma.done [#allocation6], 32
    $region29: #{tpu_custom_call.1} parent=1 // pred_fallthru
      _
    // Predicated region
    $region30: #{tpu_custom_call.1} parent=1 // pred_check
      _
    $region31: #{tpu_custom_call.1} parent=1 // pred_check_branch
      %376 = sbr.rel (0) target = $region33
    $region32: #{tpu_custom_call.1} parent=1 // pred_region
      %377 = dma.done [#allocation9], 32
    $region33: #{tpu_custom_call.1} parent=1 // pred_fallthru
      _
    %378 = vsyncpa [#allocation5], 1
    %379 = vsyncpa [#allocation6], 1
    %380 = vsyncpa [#allocation9], 1

</llo_original>
